<compile_context>
chip_gen: v6e
topology: v6e:2x2x1
jax: 0.10.0
libtpu: 0.0.40
codegen_flags: <defaults>
</compile_context>

<pallas_src>
import functools

import numpy as np
import jax
import jax.numpy as jnp
from jax.experimental import pallas as pl
from jax.experimental.pallas import tpu as pltpu


# -----------------------------------------------------------------------------
# Kernels
# -----------------------------------------------------------------------------
def _rnn_init_kernel(x_ref, wx_ref, bx_ref, h_ref, xs_ref, *, H, K, dil, pad_x):
    """h = tanh(conv_x(x)); one batch element per grid step."""
    w_cin = x_ref.shape[-1]          # W*Cin
    wc = h_ref.shape[-1]             # W*Cout (lane-dense, 128 here)

    # In-kernel "same" padding along H into a zero-edged VMEM scratch.
    if pad_x > 0:
        z = jnp.zeros((pad_x, w_cin), jnp.float32)
        xs_ref[0:pad_x, :] = z
        xs_ref[pad_x + H:pad_x + H + pad_x, :] = z
    xs_ref[pad_x:pad_x + H, :] = x_ref[0]

    # Bias initializes the accumulator once (broadcast over rows, hoisted).
    acc = jnp.broadcast_to(bx_ref[...], (H, wc)).astype(jnp.float32)

    # K row-shifted MXU matmuls; width taps + Cin are folded into wx_ref[kh].
    for kh in range(K):
        xs = xs_ref[kh * dil:kh * dil + H, :]                     # (H, W*Cin)
        acc = acc + jnp.dot(xs, wx_ref[kh],
                            preferred_element_type=jnp.float32)
    h_ref[0] = jnp.tanh(acc)


def _rnn_step_kernel(x_ref, h_ref, wx_ref, bx_ref, wh_ref, bh_ref, h_out_ref,
                     xs_ref, hs_ref, *, H, K, dil, pad_x, pad_h):
    """h_out = tanh(conv_x(x) + conv_h(h)); one batch element per grid step."""
    w_cin = x_ref.shape[-1]          # W*Cin
    wc = h_out_ref.shape[-1]         # W*Cout

    if pad_x > 0:
        zx = jnp.zeros((pad_x, w_cin), jnp.float32)
        xs_ref[0:pad_x, :] = zx
        xs_ref[pad_x + H:pad_x + H + pad_x, :] = zx
    xs_ref[pad_x:pad_x + H, :] = x_ref[0]

    if pad_h > 0:
        zh = jnp.zeros((pad_h, wc), jnp.float32)
        hs_ref[0:pad_h, :] = zh
        hs_ref[pad_h + H:pad_h + H + pad_h, :] = zh
    hs_ref[pad_h:pad_h + H, :] = h_ref[0]

    acc = jnp.broadcast_to(bx_ref[...] + bh_ref[...], (H, wc)).astype(jnp.float32)

    for kh in range(K):
        xs = xs_ref[kh * dil:kh * dil + H, :]                     # (H, W*Cin)
        acc = acc + jnp.dot(xs, wx_ref[kh],
                            preferred_element_type=jnp.float32)
        hs = hs_ref[kh:kh + H, :]                                 # (H, W*Cout)
        acc = acc + jnp.dot(hs, wh_ref[kh],
                            preferred_element_type=jnp.float32)
    h_out_ref[0] = jnp.tanh(acc)


# -----------------------------------------------------------------------------
# Host-side weight folding: conv -> per-kh matmul matrices
# -----------------------------------------------------------------------------
def _width_folded_weights(w_hwio, dil, pad, w_in, w_out):
    """(K, K, Ci, Co) HWIO conv weights -> (K, w_in*Ci, w_out*Co) matrices.

    Row kh:  M[w_i*Ci + ci, w_o*Co + co] = w[kh, kw, ci, co]  whenever
    w_i == w_o + kw*dil - pad.  Taps falling outside [0, w_in) are simply
    absent, which bakes the width "same" zero-padding into the matrix.
    """
    K = w_hwio.shape[0]
    ci = w_hwio.shape[2]
    co = w_hwio.shape[3]
    mats = []
    for kh in range(K):
        m = jnp.zeros((w_in, ci, w_out, co), w_hwio.dtype)
        for kw in range(K):
            wo = np.arange(w_out)
            wi = wo + kw * dil - pad
            ok = (wi >= 0) & (wi < w_in)
            if not ok.any():
                continue
            m = m.at[wi[ok], :, wo[ok], :].add(w_hwio[kh, kw])
        mats.append(m.reshape(w_in * ci, w_out * co))
    return jnp.stack(mats, axis=0)


# -----------------------------------------------------------------------------
# Wrapper
# -----------------------------------------------------------------------------
@functools.partial(jax.jit, static_argnames=("kernel_size", "dilation"))
def rescan_rnn(x, h, params, *, kernel_size, dilation):
    """x: (N, H, W, Cin) f32; h: None or (N, H, W, Cout) f32 -> (N, H, W, Cout)."""
    wx, bx, wh, bh = params      # wx:(K,K,Cin,Cout) bx:(Cout,) wh:(K,K,Cout,Cout) bh:(Cout,)
    N, H, W, Cin = x.shape
    Cout = wx.shape[-1]
    K = kernel_size
    assert K % 2 == 1, "symmetric 'same' padding requires an odd kernel size"
    pad_x = dilation * (K - 1) // 2
    pad_h = (K - 1) // 2
    WC = W * Cout

    x2d = x.reshape(N, H, W * Cin)                                 # lane-folded input
    wx_m = _width_folded_weights(wx, dilation, pad_x, W, W)        # (K, W*Cin, W*Cout)
    bx_r = jnp.tile(bx, (W,)).reshape(1, WC)                       # b[co] at col w*Cout+co

    out_shape = jax.ShapeDtypeStruct((N, H, WC), jnp.float32)
    out_spec = pl.BlockSpec((1, H, WC), lambda n: (n, 0, 0))
    full = lambda a: pl.BlockSpec(a.shape, lambda n: (0,) * a.ndim)
    cparams = pltpu.CompilerParams(dimension_semantics=("parallel",))

    if h is None:
        kern = functools.partial(_rnn_init_kernel, H=H, K=K, dil=dilation,
                                 pad_x=pad_x)
        out = pl.pallas_call(
            kern,
            out_shape=out_shape,
            grid=(N,),
            in_specs=[pl.BlockSpec((1, H, W * Cin), lambda n: (n, 0, 0)),
                      full(wx_m), full(bx_r)],
            out_specs=out_spec,
            scratch_shapes=[pltpu.VMEM((H + 2 * pad_x, W * Cin), jnp.float32)],
            compiler_params=cparams,
        )(x2d, wx_m, bx_r)
    else:
        h2d = h.reshape(N, H, WC)
        wh_m = _width_folded_weights(wh, 1, pad_h, W, W)           # (K, W*Cout, W*Cout)
        bh_r = jnp.tile(bh, (W,)).reshape(1, WC)
        kern = functools.partial(_rnn_step_kernel, H=H, K=K, dil=dilation,
                                 pad_x=pad_x, pad_h=pad_h)
        out = pl.pallas_call(
            kern,
            out_shape=out_shape,
            grid=(N,),
            in_specs=[pl.BlockSpec((1, H, W * Cin), lambda n: (n, 0, 0)),
                      pl.BlockSpec((1, H, WC), lambda n: (n, 0, 0)),
                      full(wx_m), full(bx_r), full(wh_m), full(bh_r)],
            out_specs=out_spec,
            scratch_shapes=[pltpu.VMEM((H + 2 * pad_x, W * Cin), jnp.float32),
                            pltpu.VMEM((H + 2 * pad_h, WC), jnp.float32)],
            compiler_params=cparams,
        )(x2d, h2d, wx_m, bx_r, wh_m, bh_r)

    return out.reshape(N, H, W, Cout)


# -----------------------------------------------------------------------------
# Pure-JAX reference (matches the PyTorch module semantics, NHWC/HWIO layout)
# -----------------------------------------------------------------------------
def _conv2d_ref(x, w, b, dil, pad):
    out = jax.lax.conv_general_dilated(
        x, w, window_strides=(1, 1),
        padding=[(pad, pad), (pad, pad)],
        rhs_dilation=(dil, dil),
        dimension_numbers=("NHWC", "HWIO", "NHWC"))
    return out + b


def rescan_rnn_reference(x, h, params, kernel_size, dilation):
    wx, bx, wh, bh = params
    K = kernel_size
    pad_x = dilation * (K - 1) // 2
    pad_h = (K - 1) // 2
    gx = _conv2d_ref(x, wx, bx, dilation, pad_x)
    if h is None:
        return jnp.tanh(gx)
    gh = _conv2d_ref(h, wh, bh, 1, pad_h)
    return jnp.tanh(gx + gh)


# -----------------------------------------------------------------------------
# Main
# -----------------------------------------------------------------------------
if __name__ == "__main__":
    N, Cin, Cout, H, W = 2, 4, 8, 16, 16      # W*Cout = 128 -> lane-dense output
    K, dilation = 3, 2

    key = jax.random.PRNGKey(0)
    ks = jax.random.split(key, 6)
    x1 = jax.random.normal(ks[0], (N, H, W, Cin), jnp.float32)
    x2 = jax.random.normal(ks[1], (N, H, W, Cin), jnp.float32)
    # Synthetic conv parameters, HWIO layout.
    wx = 0.1 * jax.random.normal(ks[2], (K, K, Cin, Cout), jnp.float32)
    bx = 0.1 * jax.random.normal(ks[3], (Cout,), jnp.float32)
    wh = 0.1 * jax.random.normal(ks[4], (K, K, Cout, Cout), jnp.float32)
    bh = 0.1 * jax.random.normal(ks[5], (Cout,), jnp.float32)
    params = (wx, bx, wh, bh)

    # Branch 1: h is None.  Branch 2: recurrent step with previous h.
    h1 = rescan_rnn(x1, None, params, kernel_size=K, dilation=dilation)
    h2 = rescan_rnn(x2, h1, params, kernel_size=K, dilation=dilation)
    jax.block_until_ready((h1, h2))

    # Verify against the pure-JAX reference.  Tolerance allows for possible
    # reduced-precision MXU contraction passes in the in-kernel f32 matmuls vs
    # the XLA conv path; any structural bug would produce errors >> 1e-2.
    rh1 = rescan_rnn_reference(x1, None, params, K, dilation)
    rh2 = rescan_rnn_reference(x2, rh1, params, K, dilation)
    for got, ref in ((h1, rh1), (h2, rh2)):
        err = float(jnp.max(jnp.abs(got - ref)))
        assert np.allclose(np.asarray(got), np.asarray(ref),
                           atol=1e-2, rtol=1e-2), err

    print("KERNEL_OK")
</pallas_src>

<mosaic_0001>
module attributes {stable_mosaic.version = 11 : i64} {
  func.func @_rnn_init_kernel(%arg0: i32, %arg1: memref<1x16x64xf32, #tpu.memory_space<vmem>>, %arg2: memref<3x64x128xf32, #tpu.memory_space<vmem>>, %arg3: memref<1x128xf32, #tpu.memory_space<vmem>>, %arg4: memref<1x16x128xf32, #tpu.memory_space<vmem>>, %arg5: memref<20x64xf32, #tpu.memory_space<vmem>>) attributes {dimension_semantics = [#tpu.dimension_semantics<parallel>], iteration_bounds = array<i64: 2>, scalar_prefetch = 0 : i64, scratch_operands = 1 : i64, tpu.core_type = #tpu.core_type<tc>, window_params = [{transform_indices = @transform_0, window_bounds = array<i64: 1, 16, 64>}, {pipeline_mode = #tpu.pipeline_mode<synchronous>, transform_indices = @transform_1, window_bounds = array<i64: 3, 64, 128>}, {pipeline_mode = #tpu.pipeline_mode<synchronous>, transform_indices = @transform_2, window_bounds = array<i64: 1, 128>}, {transform_indices = @transform_3, window_bounds = array<i64: 1, 16, 128>}]} {
    %cst = arith.constant 0.000000e+00 : f32
    %0 = vector.broadcast %cst : f32 to vector<2x64xf32>
    %c0 = arith.constant 0 : index
    %c0_0 = arith.constant 0 : index
    %1 = vector.load %arg5[%c0, %c0_0] : memref<20x64xf32, #tpu.memory_space<vmem>>, vector<2x64xf32>
    tpu.vector_store %arg5[%c0, %c0_0], %0 {strides = array<i32>} : memref<20x64xf32, #tpu.memory_space<vmem>>, vector<2x64xf32>,
    %c18 = arith.constant 18 : index
    %c0_1 = arith.constant 0 : index
    %2 = vector.load %arg5[%c18, %c0_1] : memref<20x64xf32, #tpu.memory_space<vmem>>, vector<2x64xf32>
    tpu.vector_store %arg5[%c18, %c0_1], %0 {strides = array<i32>} : memref<20x64xf32, #tpu.memory_space<vmem>>, vector<2x64xf32>,
    %c0_2 = arith.constant 0 : index
    %c0_3 = arith.constant 0 : index
    %c0_4 = arith.constant 0 : index
    %3 = vector.load %arg1[%c0_2, %c0_3, %c0_4] : memref<1x16x64xf32, #tpu.memory_space<vmem>>, vector<1x16x64xf32>
    %4 = vector.shape_cast %3 : vector<1x16x64xf32> to vector<16x64xf32>
    %c2 = arith.constant 2 : index
    %c0_5 = arith.constant 0 : index
    %5 = vector.load %arg5[%c2, %c0_5] : memref<20x64xf32, #tpu.memory_space<vmem>>, vector<16x64xf32>
    tpu.vector_store %arg5[%c2, %c0_5], %4 {strides = array<i32>} : memref<20x64xf32, #tpu.memory_space<vmem>>, vector<16x64xf32>,
    %c0_6 = arith.constant 0 : index
    %c0_7 = arith.constant 0 : index
    %6 = vector.load %arg3[%c0_6, %c0_7] : memref<1x128xf32, #tpu.memory_space<vmem>>, vector<1x128xf32>
    %7 = vector.shape_cast %6 : vector<1x128xf32> to vector<1x128xf32>
    %8 = vector.broadcast %7 : vector<1x128xf32> to vector<16x128xf32>
    %c0_8 = arith.constant 0 : index
    %c0_9 = arith.constant 0 : index
    %9 = vector.load %arg5[%c0_8, %c0_9] : memref<20x64xf32, #tpu.memory_space<vmem>>, vector<16x64xf32>
    %c0_10 = arith.constant 0 : index
    %c0_11 = arith.constant 0 : index
    %c0_12 = arith.constant 0 : index
    %10 = vector.load %arg2[%c0_10, %c0_11, %c0_12] : memref<3x64x128xf32, #tpu.memory_space<vmem>>, vector<1x64x128xf32>
    %11 = vector.shape_cast %10 : vector<1x64x128xf32> to vector<64x128xf32>
    %cst_13 = arith.constant dense<0.000000e+00> : vector<16x128xf32>
    %12 = tpu.matmul %9, %11, %cst_13 {dimension_numbers = #tpu.dot_dimension_numbers<[1], [0], [0], [1], [0, 0, 1, 1], [], []>} : vector<16x64xf32>, vector<64x128xf32>, vector<16x128xf32> -> vector<16x128xf32>
    %13 = arith.addf %8, %12 : vector<16x128xf32>
    %c2_14 = arith.constant 2 : index
    %c0_15 = arith.constant 0 : index
    %14 = vector.load %arg5[%c2_14, %c0_15] : memref<20x64xf32, #tpu.memory_space<vmem>>, vector<16x64xf32>
    %c1 = arith.constant 1 : index
    %c0_16 = arith.constant 0 : index
    %c0_17 = arith.constant 0 : index
    %15 = vector.load %arg2[%c1, %c0_16, %c0_17] : memref<3x64x128xf32, #tpu.memory_space<vmem>>, vector<1x64x128xf32>
    %16 = vector.shape_cast %15 : vector<1x64x128xf32> to vector<64x128xf32>
    %cst_18 = arith.constant dense<0.000000e+00> : vector<16x128xf32>
    %17 = tpu.matmul %14, %16, %cst_18 {dimension_numbers = #tpu.dot_dimension_numbers<[1], [0], [0], [1], [0, 0, 1, 1], [], []>} : vector<16x64xf32>, vector<64x128xf32>, vector<16x128xf32> -> vector<16x128xf32>
    %18 = arith.addf %13, %17 : vector<16x128xf32>
    %c4 = arith.constant 4 : index
    %c0_19 = arith.constant 0 : index
    %19 = vector.load %arg5[%c4, %c0_19] : memref<20x64xf32, #tpu.memory_space<vmem>>, vector<16x64xf32>
    %c2_20 = arith.constant 2 : index
    %c0_21 = arith.constant 0 : index
    %c0_22 = arith.constant 0 : index
    %20 = vector.load %arg2[%c2_20, %c0_21, %c0_22] : memref<3x64x128xf32, #tpu.memory_space<vmem>>, vector<1x64x128xf32>
    %21 = vector.shape_cast %20 : vector<1x64x128xf32> to vector<64x128xf32>
    %cst_23 = arith.constant dense<0.000000e+00> : vector<16x128xf32>
    %22 = tpu.matmul %19, %21, %cst_23 {dimension_numbers = #tpu.dot_dimension_numbers<[1], [0], [0], [1], [0, 0, 1, 1], [], []>} : vector<16x64xf32>, vector<64x128xf32>, vector<16x128xf32> -> vector<16x128xf32>
    %23 = arith.addf %18, %22 : vector<16x128xf32>
    %24 = math.tanh %23 : vector<16x128xf32>
    %c0_24 = arith.constant 0 : index
    %c0_25 = arith.constant 0 : index
    %c0_26 = arith.constant 0 : index
    %25 = vector.load %arg4[%c0_24, %c0_25, %c0_26] : memref<1x16x128xf32, #tpu.memory_space<vmem>>, vector<1x16x128xf32>
    %26 = vector.shape_cast %25 : vector<1x16x128xf32> to vector<16x128xf32>
    %27 = vector.shape_cast %24 : vector<16x128xf32> to vector<1x16x128xf32>
    tpu.vector_store %arg4[%c0_24, %c0_25, %c0_26], %27 {strides = array<i32>} : memref<1x16x128xf32, #tpu.memory_space<vmem>>, vector<1x16x128xf32>,
    return
  }
  func.func @transform_0(%arg0: i32) -> (i32, i32, i32) {
    %c0_i32 = arith.constant 0 : i32
    %c0_i32_0 = arith.constant 0 : i32
    %c0_i32_1 = arith.constant 0 : i32
    return %arg0, %c0_i32, %c0_i32_0 : i32, i32, i32
  }
  func.func @transform_1(%arg0: i32) -> (i32, i32, i32) {
    %c0_i32 = arith.constant 0 : i32
    %c0_i32_0 = arith.constant 0 : i32
    %c0_i32_1 = arith.constant 0 : i32
    %c0_i32_2 = arith.constant 0 : i32
    return %c0_i32, %c0_i32_0, %c0_i32_1 : i32, i32, i32
  }
  func.func @transform_2(%arg0: i32) -> (i32, i32) {
    %c0_i32 = arith.constant 0 : i32
    %c0_i32_0 = arith.constant 0 : i32
    %c0_i32_1 = arith.constant 0 : i32
    return %c0_i32, %c0_i32_0 : i32, i32
  }
  func.func @transform_3(%arg0: i32) -> (i32, i32, i32) {
    %c0_i32 = arith.constant 0 : i32
    %c0_i32_0 = arith.constant 0 : i32
    %c0_i32_1 = arith.constant 0 : i32
    return %arg0, %c0_i32, %c0_i32_0 : i32, i32, i32
  }
}

</mosaic_0001>

<llo_original>
// kernel: tile.8
$region0: #{tile.8}
  #allocation0 [shape = 's32[1]{0}', space=sflag, size = 0x4, scoped, tag = 'scoped memory for tile.8']
  %s0 = inlined_call_operand.vmem [shape: f32[8], index: 0, kind: input, shape index: {}]
  %s1 = inlined_call_operand.vmem [shape: f32[16,8], index: 1, kind: output, shape index: {}]
  // Predicated region
  $region2: #{tile.8} parent=0 // pred_check
    _
  $region3: #{tile.8} parent=0 // pred_check_branch
    %3 = sbr.rel (0) target = $region5
  $region4: #{tile.8} parent=0 // pred_region
    _
  $region5: #{tile.8} parent=0 // pred_fallthru
    _
  %v4 = vld [vmem:[%s0] ss:$0 sm:$0xff]
  %5 = vst [vmem:[%s1] sm:$0xff] %v4
  %s6 = scalar_lea.vmem %s1, 8
  %7 = vst [vmem:[%s6] sm:$0xff] %v4

// kernel: tile.9
$region0: #{tile.9}
  %s0 = inlined_call_operand.vmem [shape: f32[16,8], index: 0, kind: input, shape index: {}]
  %s1 = inlined_call_operand.vmem [shape: f32[1,128], index: 1, kind: output, shape index: {}]
  $region1: #{tile.9} parent=0
    #allocation0 [shape = 'u8[4096]{0}', space=vmem, size = 0x1000, scoped, tag = 'scoped mem for output reshape']
    %v2 = vld [vmem:[%s0] sm:$0x1]
    %vm3 = vcmask 64512
    %4 = vst.msk [vmem:[#allocation0] sm:$0x1] %vm3, %v2
    %s5 = scalar_lea.vmem %s0, 15
    %v6 = vld [vmem:[%s5] sm:$0x1]
    %7 = vrot.lane.b32.xlu0 %v6, 120
    %v8 = vpop.permute.xlu0 %7
    %vm9 = vcmask 1048512
    %10 = vst.msk [vmem:[#allocation0] sm:$0x1] %vm9, %v8
    %s11 = scalar_lea.vmem %s0, 14
    %v12 = vld [vmem:[%s11] sm:$0x1]
    %13 = vrot.lane.b32.xlu0 %v12, 112
    %v14 = vpop.permute.xlu0 %13
    %vm15 = vcmask 982912
    %16 = vst.msk [vmem:[#allocation0] sm:$0x1] %vm15, %v14
    %s17 = scalar_lea.vmem %s0, 13
    %v18 = vld [vmem:[%s17] sm:$0x1]
    %19 = vrot.lane.b32.xlu0 %v18, 104
    %v20 = vpop.permute.xlu0 %19
    %vm21 = vcmask 917312
    %22 = vst.msk [vmem:[#allocation0] sm:$0x1] %vm21, %v20
    %s23 = scalar_lea.vmem %s0, 12
    %v24 = vld [vmem:[%s23] sm:$0x1]
    %25 = vrot.lane.b32.xlu0 %v24, 96
    %v26 = vpop.permute.xlu0 %25
    %vm27 = vcmask 851712
    %28 = vst.msk [vmem:[#allocation0] sm:$0x1] %vm27, %v26
    %s29 = scalar_lea.vmem %s0, 11
    %v30 = vld [vmem:[%s29] sm:$0x1]
    %31 = vrot.lane.b32.xlu0 %v30, 88
    %v32 = vpop.permute.xlu0 %31
    %vm33 = vcmask 786112
    %34 = vst.msk [vmem:[#allocation0] sm:$0x1] %vm33, %v32
    %s35 = scalar_lea.vmem %s0, 10
    %v36 = vld [vmem:[%s35] sm:$0x1]
    %37 = vrot.lane.b32.xlu0 %v36, 80
    %v38 = vpop.permute.xlu0 %37
    %vm39 = vcmask 720512
    %40 = vst.msk [vmem:[#allocation0] sm:$0x1] %vm39, %v38
    %s41 = scalar_lea.vmem %s0, 9
    %v42 = vld [vmem:[%s41] sm:$0x1]
    %43 = vrot.lane.b32.xlu0 %v42, 72
    %v44 = vpop.permute.xlu0 %43
    %vm45 = vcmask 654912
    %46 = vst.msk [vmem:[#allocation0] sm:$0x1] %vm45, %v44
    %s47 = scalar_lea.vmem %s0, 8
    %v48 = vld [vmem:[%s47] sm:$0x1]
    %49 = vrot.lane.b32.xlu0 %v48, 64
    %v50 = vpop.permute.xlu0 %49
    %vm51 = vcmask 589312
    %52 = vst.msk [vmem:[#allocation0] sm:$0x1] %vm51, %v50
    %s53 = scalar_lea.vmem %s0, 7
    %v54 = vld [vmem:[%s53] sm:$0x1]
    %55 = vrot.lane.b32.xlu0 %v54, 56
    %v56 = vpop.permute.xlu0 %55
    %vm57 = vcmask 523712
    %58 = vst.msk [vmem:[#allocation0] sm:$0x1] %vm57, %v56
    %s59 = scalar_lea.vmem %s0, 6
    %v60 = vld [vmem:[%s59] sm:$0x1]
    %61 = vrot.lane.b32.xlu0 %v60, 48
    %v62 = vpop.permute.xlu0 %61
    %vm63 = vcmask 458112
    %64 = vst.msk [vmem:[#allocation0] sm:$0x1] %vm63, %v62
    %s65 = scalar_lea.vmem %s0, 5
    %v66 = vld [vmem:[%s65] sm:$0x1]
    %67 = vrot.lane.b32.xlu0 %v66, 40
    %v68 = vpop.permute.xlu0 %67
    %vm69 = vcmask 392512
    %70 = vst.msk [vmem:[#allocation0] sm:$0x1] %vm69, %v68
    %s71 = scalar_lea.vmem %s0, 4
    %v72 = vld [vmem:[%s71] sm:$0x1]
    %73 = vrot.lane.b32.xlu0 %v72, 32
    %v74 = vpop.permute.xlu0 %73
    %vm75 = vcmask 326912
    %76 = vst.msk [vmem:[#allocation0] sm:$0x1] %vm75, %v74
    %s77 = scalar_lea.vmem %s0, 3
    %v78 = vld [vmem:[%s77] sm:$0x1]
    %79 = vrot.lane.b32.xlu0 %v78, 24
    %v80 = vpop.permute.xlu0 %79
    %vm81 = vcmask 261312
    %82 = vst.msk [vmem:[#allocation0] sm:$0x1] %vm81, %v80
    %s83 = scalar_lea.vmem %s0, 2
    %v84 = vld [vmem:[%s83] sm:$0x1]
    %85 = vrot.lane.b32.xlu0 %v84, 16
    %v86 = vpop.permute.xlu0 %85
    %vm87 = vcmask 195712
    %88 = vst.msk [vmem:[#allocation0] sm:$0x1] %vm87, %v86
    %s89 = scalar_lea.vmem %s0, 1
    %v90 = vld [vmem:[%s89] sm:$0x1]
    %91 = vrot.lane.b32.xlu0 %v90, 8
    %v92 = vpop.permute.xlu0 %91
    %vm93 = vcmask 130112
    %94 = vst.msk [vmem:[#allocation0] sm:$0x1] %vm93, %v92
    %s96 = sshll.u32 1, 1
    %s97 = ssub.s32 %s96, 1
    %v99 = vld [vmem:[#allocation0] sm:%s97]
    %s100 = sshll.u32 1, 1
    %s101 = ssub.s32 %s100, 1
    %102 = vst [vmem:[%s1] sm:%s101] %v99

// kernel: rescan_rnn.1
$region0: #{rescan_rnn.1}
  #allocation0 [shape = 'u32[]', space=smem, size = 0x4, offset = 0x4, fixed_abs, tag = 'smem constant byte address 0x4 - core index']
  #allocation1 [shape = 'u32[144,128]{1,0:T(1,128)}', space=vmem, size = 0x12000, scoped, tag = 'internal scratch']
  #allocation2 [shape = 'f32[20,64]{1,0:T(8,128)}', space=vmem, size = 0x3000, scoped, tag = 'scratch operand']
  %s0 = inlined_call_operand.vmem [shape: f32[2,16,64], index: 0, kind: input, shape index: {}]
  %s1 = inlined_call_operand.vmem [shape: f32[3,64,128], index: 1, kind: input, shape index: {}]
  %s2 = inlined_call_operand.vmem [shape: f32[1,128], index: 2, kind: input, shape index: {}]
  %s3 = inlined_call_operand.vmem [shape: f32[2,16,128], index: 3, kind: output, shape index: {}]
  %s4 = sld [smem:[#allocation0]]
  $region45: #{rescan_rnn.1} parent=0
    _
  %s6 = ssub.s32 1, %s4
  %s7 = scalar_select 0, %s6, %s4
  loop: start=0, step=1, limit=4
  $region2: #{rescan_rnn.1} parent=0 // loop_pre_header
    _
  $region3: #{rescan_rnn.1} parent=0 // loop_header
    %s9 = sphi 0, %s13
    %p10 = scmp.ge.s32.totalorder %s9, 4
    %s19 = sphi 0, %s21
    %s22 = sphi 0, %s19
    %s23 = sphi 0, %s22
    %s39 = sphi 0, %s23
    %s43 = sphi 0, %s43
    %s45 = sphi 0, %s43
    %s46 = sphi 0, %s45
    %s60 = sphi 0, %s46
    %s64 = sphi 0, %s64
    %s66 = sphi 0, %s64
    %s67 = sphi 0, %s66
    %s81 = sphi 0, %s67
    %s87 = sphi 0, %s89
    %s90 = sphi 0, %s87
    %s91 = sphi 0, %s90
    %s107 = sphi 0, %s91
  $region4: #{rescan_rnn.1} parent=0 // loop_header_branch
    %12 = sbr.rel (%p10) target = $region8
  $region5: #{rescan_rnn.1} parent=0 // loop_body
    %s14 = ssub.s32 %s9, 1
    %s15 = ssub.s32 %s9, 2
    %s16 = sadd.s32 %s9, 1
    %s17 = ssub.s32 %s9, %s16
    %p18 = scmp.eq.s32.totalorder %s17, 0
    %s20 = sadd.s32 %s19, 1
    %s21 = scalar_select %p18, %s19, %s20
    %p24 = pneg %p18
    %p25 = scmp.eq.s32.totalorder %s9, 1
    %p26 = por %p24, %p25
    %p27 = scmp.ne.s32.totalorder %s19, %s22
    %p28 = scmp.eq.s32.totalorder %s9, 0
    %p29 = por %p27, %p28
    %p30 = scmp.ne.s32.totalorder %s19, %s22
    %p31 = scmp.eq.s32.totalorder %s14, 1
    %p32 = por %p30, %p31
    %p33 = scmp.ne.s32.totalorder %s22, %s23
    %p34 = scmp.eq.s32.totalorder %s14, 0
    %p35 = por %p33, %p34
    %p36 = scmp.ne.s32.totalorder %s22, %s23
    %p37 = scmp.eq.s32.totalorder %s15, 1
    %p38 = por %p36, %p37
    %p40 = scmp.ne.s32.totalorder %s23, %s39
    %p41 = scmp.eq.s32.totalorder %s15, 0
    %p42 = por %p40, %p41
    %s44 = sadd.s32 %s43, 1
    %p47 = scmp.eq.s32.totalorder %s9, 1
    %p48 = scmp.ne.s32.totalorder %s43, %s45
    %p49 = scmp.eq.s32.totalorder %s9, 0
    %p50 = por %p48, %p49
    %p51 = scmp.ne.s32.totalorder %s43, %s45
    %p52 = scmp.eq.s32.totalorder %s14, 1
    %p53 = por %p51, %p52
    %p54 = scmp.ne.s32.totalorder %s45, %s46
    %p55 = scmp.eq.s32.totalorder %s14, 0
    %p56 = por %p54, %p55
    %p57 = scmp.ne.s32.totalorder %s45, %s46
    %p58 = scmp.eq.s32.totalorder %s15, 1
    %p59 = por %p57, %p58
    %p61 = scmp.ne.s32.totalorder %s46, %s60
    %p62 = scmp.eq.s32.totalorder %s15, 0
    %p63 = por %p61, %p62
    %s65 = sadd.s32 %s64, 1
    %p68 = scmp.eq.s32.totalorder %s9, 1
    %p69 = scmp.ne.s32.totalorder %s64, %s66
    %p70 = scmp.eq.s32.totalorder %s9, 0
    %p71 = por %p69, %p70
    %p72 = scmp.ne.s32.totalorder %s64, %s66
    %p73 = scmp.eq.s32.totalorder %s14, 1
    %p74 = por %p72, %p73
    %p75 = scmp.ne.s32.totalorder %s66, %s67
    %p76 = scmp.eq.s32.totalorder %s14, 0
    %p77 = por %p75, %p76
    %p78 = scmp.ne.s32.totalorder %s66, %s67
    %p79 = scmp.eq.s32.totalorder %s15, 1
    %p80 = por %p78, %p79
    %p82 = scmp.ne.s32.totalorder %s67, %s81
    %p83 = scmp.eq.s32.totalorder %s15, 0
    %p84 = por %p82, %p83
    %s85 = ssub.s32 %s9, %s16
    %p86 = scmp.eq.s32.totalorder %s85, 0
    %s88 = sadd.s32 %s87, 1
    %s89 = scalar_select %p86, %s87, %s88
    %p92 = pneg %p86
    %p93 = scmp.eq.s32.totalorder %s9, 1
    %p94 = por %p92, %p93
    %p95 = scmp.ne.s32.totalorder %s87, %s90
    %p96 = scmp.eq.s32.totalorder %s9, 0
    %p97 = por %p95, %p96
    %p98 = scmp.ne.s32.totalorder %s87, %s90
    %p99 = scmp.eq.s32.totalorder %s14, 1
    %p100 = por %p98, %p99
    %p101 = scmp.ne.s32.totalorder %s90, %s91
    %p102 = scmp.eq.s32.totalorder %s14, 0
    %p103 = por %p101, %p102
    %p104 = scmp.ne.s32.totalorder %s90, %s91
    %p105 = scmp.eq.s32.totalorder %s15, 1
    %p106 = por %p104, %p105
    %p108 = scmp.ne.s32.totalorder %s91, %s107
    %p109 = scmp.eq.s32.totalorder %s15, 0
    %p110 = por %p108, %p109
    %p111 = scmp.le.s32.totalorder 1, %s9
    %p112 = scmp.lt.s32.totalorder %s9, 3
    %p113 = pnand %p111, %p112
    %p114 = pneg %p113
    // Predicated region
    $region9: #{rescan_rnn.1} parent=5 // pred_check
      _
    $region10: #{rescan_rnn.1} parent=5 // pred_check_branch
      %116 = sbr.rel (%p113) target = $region12
    $region11: #{rescan_rnn.1} parent=5 // pred_region
      %s117 = ssub.s32 %s9, 1
      // Predicated region
      $region13: #{rescan_rnn.1} parent=11 // pred_check
        %p118 = pneg %p56
      $region14: #{rescan_rnn.1} parent=11 // pred_check_branch
        %120 = sbr.rel (%p118) target = $region16
      $region15: #{rescan_rnn.1} parent=11 // pred_region
        _
      $region16: #{rescan_rnn.1} parent=11 // pred_fallthru
        _
      // Predicated region
      $region17: #{rescan_rnn.1} parent=11 // pred_check
        %p121 = pneg %p77
      $region18: #{rescan_rnn.1} parent=11 // pred_check_branch
        %123 = sbr.rel (%p121) target = $region20
      $region19: #{rescan_rnn.1} parent=11 // pred_region
        _
      $region20: #{rescan_rnn.1} parent=11 // pred_fallthru
        _
    $region12: #{rescan_rnn.1} parent=5 // pred_fallthru
      _
    %p124 = scmp.lt.s32.totalorder %s9, 2
    // Predicated region
    $region21: #{rescan_rnn.1} parent=5 // pred_check
      %p125 = pneg %p124
    $region22: #{rescan_rnn.1} parent=5 // pred_check_branch
      %127 = sbr.rel (%p125) target = $region24
    $region23: #{rescan_rnn.1} parent=5 // pred_region
      // Predicated region
      $region25: #{rescan_rnn.1} parent=23 // pred_check
        %p128 = pneg %p29
      $region26: #{rescan_rnn.1} parent=23 // pred_check_branch
        %130 = sbr.rel (%p128) target = $region28
      $region27: #{rescan_rnn.1} parent=23 // pred_region
        %p131 = scmp.lt.s32.totalorder %s9, 1
        %s132 = scalar_select %p131, %s9, 1
        %s133 = smul.addr %s132, 2
        %s134 = smul.addr %s133, 8
        %s135 = scalar_lea.vmem %s0, %s134
      $region28: #{rescan_rnn.1} parent=23 // pred_fallthru
        _
    $region24: #{rescan_rnn.1} parent=5 // pred_fallthru
      _
    %p136 = scmp.le.s32.totalorder 1, %s9
    %p137 = scmp.lt.s32.totalorder %s9, 3
    %p138 = pnand %p136, %p137
    %p139 = pneg %p138
    // Predicated region
    $region29: #{rescan_rnn.1} parent=5 // pred_check
      _
    $region30: #{rescan_rnn.1} parent=5 // pred_check_branch
      %141 = sbr.rel (%p138) target = $region32
    $region31: #{rescan_rnn.1} parent=5 // pred_region
      %s142 = ssub.s32 %s9, 1
      %p143 = scmp.lt.s32.totalorder %s14, 1
      %s144 = scalar_select %p143, %s14, 1
      %s145 = smul.addr %s144, 2
      %s146 = smul.addr %s145, 8
      %s147 = scalar_lea.vmem %s0, %s146
      %p148 = pneg %p35
      %p149 = pneg %p32
      %p150 = pneg %p56
      %p151 = pneg %p53
      %p152 = pneg %p77
      %p153 = pneg %p74
      %p154 = pneg %p103
      %p155 = pneg %p100
      %p156 = scmp.lt.s32.totalorder %s14, 1
      %s157 = scalar_select %p156, %s14, 1
      %s158 = smul.addr %s157, 2
      %s159 = smul.addr %s158, 8
      %s160 = scalar_lea.vmem %s3, %s159
      %p161 = scmp.lt.s32.totalorder %s14, 1
      %s162 = scalar_select %p161, %s14, 1
      %s163 = smul.addr %s162, 2
      %s164 = smul.addr %s163, 8
      %s165 = scalar_lea.vmem %s0, %s164
      %p166 = scmp.lt.s32.totalorder %s14, 1
      %s167 = scalar_select %p166, %s14, 1
      %s168 = smul.addr %s167, 2
      %s169 = smul.addr %s168, 8
      %s170 = scalar_lea.vmem %s3, %s169
      %vm171 = vcmask 517120
      %172 = vst.msk [vmem:[#allocation2] sm:$0x3] %vm171, 0.0
      %173 = vst.msk [vmem:[#allocation2 + $0x12] sm:$0x3] %vm171, 0.0
      %v174 = vld [vmem:[%s165] sm:$0xff]
      %v175 = vld [vmem:[%s165 + $0x8] sm:$0xff]
      %vm176 = vcmask 523264
      %177 = vst.msk [vmem:[#allocation2 + $0x2] sm:$0xff] %vm176, %v174
      %178 = vst.msk [vmem:[#allocation2 + $0xa] sm:$0xff] %vm176, %v175
      %v179 = vld [vmem:[%s2] sm:$0x1]
      %v181 = vlaneseq
      %v182 = vshrl.u32 %v181, 7
      %v183 = vsub.s32 0, %v182
      %v184 = vrot.slane %v179, %v183
      %v186 = vld [vmem:[#allocation2] sm:$0xff]
      %v187 = vld [vmem:[#allocation2 + $0x8] sm:$0xff]
      %v188 = vld [vmem:[%s1] sm:$0xff]
      %v189 = vld [vmem:[%s1 + $0x8] sm:$0xff]
      %v190 = vld [vmem:[%s1 + $0x10] sm:$0xff]
      %v191 = vld [vmem:[%s1 + $0x18] sm:$0xff]
      %v192 = vld [vmem:[%s1 + $0x20] sm:$0xff]
      %v193 = vld [vmem:[%s1 + $0x28] sm:$0xff]
      %v194 = vld [vmem:[%s1 + $0x30] sm:$0xff]
      %v195 = vld [vmem:[%s1 + $0x38] sm:$0xff]
      %v197 = vsel %vm176, %v186, 0
      %v200 = vsel %vm176, %v187, 0
      %202 = vmatprep.subr.mxu0 0.0
      %203 = vmatpush1.msra.mxu0 0.0
      %204 = vmatprep.subr.mxu0 0.0
      %205 = vmatpush1.msra.mxu0 0.0
      %206 = vmatprep.subr.mxu0 0.0
      %207 = vmatpush1.msra.mxu0 0.0
      %208 = vmatprep.subr.mxu0 0.0
      %209 = vmatpush1.msra.mxu0 0.0
      %210 = vmatprep.subr.mxu0 0.0
      %211 = vmatpush1.msra.mxu0 0.0
      %212 = vmatprep.subr.mxu0 0.0
      %213 = vmatpush1.msra.mxu0 0.0
      %214 = vmatprep.subr.mxu0 0.0
      %215 = vmatpush1.msra.mxu0 0.0
      %216 = vmatprep.subr.mxu0 0.0
      %217 = vmatpush1.msra.mxu0 0.0
      %218 = vmatprep.subr.mxu0 0.0
      %219 = vmatpush1.msra.mxu0 %v195
      %220 = vmatprep.subr.mxu0 0.0
      %221 = vmatpush1.msra.mxu0 %v194
      %222 = vmatprep.subr.mxu0 0.0
      %223 = vmatpush1.msra.mxu0 %v193
      %224 = vmatprep.subr.mxu0 0.0
      %225 = vmatpush1.msra.mxu0 %v192
      %226 = vmatprep.subr.mxu0 0.0
      %227 = vmatpush1.msra.mxu0 %v191
      %228 = vmatprep.subr.mxu0 0.0
      %229 = vmatpush1.msra.mxu0 %v190
      %230 = vmatprep.subr.mxu0 0.0
      %231 = vmatpush1.msra.mxu0 %v189
      %232 = vmatprep.subr.mxu0 0.0
      %233 = vmatpush1.msra.mxu0 %v188
      %234 = vmatprep.subr.mxu0 0.0
      %235 = vmatpush2.msra.mxu0 0.0
      %236 = vmatprep.subr.mxu0 0.0
      %237 = vmatpush2.msra.mxu0 0.0
      %238 = vmatprep.subr.mxu0 0.0
      %239 = vmatpush2.msra.mxu0 0.0
      %240 = vmatprep.subr.mxu0 0.0
      %241 = vmatpush2.msra.mxu0 0.0
      %242 = vmatprep.subr.mxu0 0.0
      %243 = vmatpush2.msra.mxu0 0.0
      %244 = vmatprep.subr.mxu0 0.0
      %245 = vmatpush2.msra.mxu0 0.0
      %246 = vmatprep.subr.mxu0 0.0
      %247 = vmatpush2.msra.mxu0 0.0
      %248 = vmatprep.subr.mxu0 0.0
      %249 = vmatpush2.msra.mxu0 0.0
      %250 = vmatprep.subr.mxu0 0.0
      %251 = vmatpush2.msra.mxu0 0.0
      %252 = vmatprep.subr.mxu0 0.0
      %253 = vmatpush2.msra.mxu0 0.0
      %254 = vmatprep.subr.mxu0 0.0
      %255 = vmatpush2.msra.mxu0 0.0
      %256 = vmatprep.subr.mxu0 0.0
      %257 = vmatpush2.msra.mxu0 0.0
      %258 = vmatprep.subr.mxu0 0.0
      %259 = vmatpush2.msra.mxu0 0.0
      %260 = vmatprep.subr.mxu0 0.0
      %261 = vmatpush2.msra.mxu0 0.0
      %262 = vmatprep.subr.mxu0 0.0
      %263 = vmatpush2.msra.mxu0 0.0
      %264 = vmatprep.subr.mxu0 0.0
      %265 = vmatpush2.msra.mxu0 0.0
      %266 = vmatprep.mubr.f32.mxu0 0.0
      %267 = vmatmul.mubr.f32.gmra.mxu0 %v197
      %v268 = vpop.f32.mrf.mxu0
      %v269 = vadd.f32 0.0, %v268
      %v270 = vpop.f32.mrf.mxu0
      %271 = vmatprep.mubr.f32.mxu0 0.0
      %272 = vmatmul.mubr.f32.gmra.mxu0 %v200
      %v273 = vpop.f32.mrf.mxu0
      %v274 = vadd.f32 0.0, %v273
      %v275 = vpop.f32.mrf.mxu0
      %276 = vdwg.mxu0
      %v277 = vadd.f32 %v184, %v269
      %v278 = vadd.f32 %v184, %v274
      %v279 = vld [vmem:[#allocation2 + $0x2] sm:$0xff]
      %v280 = vld [vmem:[#allocation2 + $0xa] sm:$0xff]
      %s281 = scalar_lea.vmem %s1, 64
      %v282 = vld [vmem:[%s281] sm:$0xff]
      %v283 = vld [vmem:[%s281 + $0x8] sm:$0xff]
      %v284 = vld [vmem:[%s281 + $0x10] sm:$0xff]
      %v285 = vld [vmem:[%s281 + $0x18] sm:$0xff]
      %v286 = vld [vmem:[%s281 + $0x20] sm:$0xff]
      %v287 = vld [vmem:[%s281 + $0x28] sm:$0xff]
      %v288 = vld [vmem:[%s281 + $0x30] sm:$0xff]
      %v289 = vld [vmem:[%s281 + $0x38] sm:$0xff]
      %v291 = vsel %vm176, %v279, 0
      %v294 = vsel %vm176, %v280, 0
      %296 = vmatprep.subr.mxu0 0.0
      %297 = vmatpush1.msra.mxu0 0.0
      %298 = vmatprep.subr.mxu0 0.0
      %299 = vmatpush1.msra.mxu0 0.0
      %300 = vmatprep.subr.mxu0 0.0
      %301 = vmatpush1.msra.mxu0 0.0
      %302 = vmatprep.subr.mxu0 0.0
      %303 = vmatpush1.msra.mxu0 0.0
      %304 = vmatprep.subr.mxu0 0.0
      %305 = vmatpush1.msra.mxu0 0.0
      %306 = vmatprep.subr.mxu0 0.0
      %307 = vmatpush1.msra.mxu0 0.0
      %308 = vmatprep.subr.mxu0 0.0
      %309 = vmatpush1.msra.mxu0 0.0
      %310 = vmatprep.subr.mxu0 0.0
      %311 = vmatpush1.msra.mxu0 0.0
      %312 = vmatprep.subr.mxu0 0.0
      %313 = vmatpush1.msra.mxu0 %v289
      %314 = vmatprep.subr.mxu0 0.0
      %315 = vmatpush1.msra.mxu0 %v288
      %316 = vmatprep.subr.mxu0 0.0
      %317 = vmatpush1.msra.mxu0 %v287
      %318 = vmatprep.subr.mxu0 0.0
      %319 = vmatpush1.msra.mxu0 %v286
      %320 = vmatprep.subr.mxu0 0.0
      %321 = vmatpush1.msra.mxu0 %v285
      %322 = vmatprep.subr.mxu0 0.0
      %323 = vmatpush1.msra.mxu0 %v284
      %324 = vmatprep.subr.mxu0 0.0
      %325 = vmatpush1.msra.mxu0 %v283
      %326 = vmatprep.subr.mxu0 0.0
      %327 = vmatpush1.msra.mxu0 %v282
      %328 = vmatprep.subr.mxu0 0.0
      %329 = vmatpush2.msra.mxu0 0.0
      %330 = vmatprep.subr.mxu0 0.0
      %331 = vmatpush2.msra.mxu0 0.0
      %332 = vmatprep.subr.mxu0 0.0
      %333 = vmatpush2.msra.mxu0 0.0
      %334 = vmatprep.subr.mxu0 0.0
      %335 = vmatpush2.msra.mxu0 0.0
      %336 = vmatprep.subr.mxu0 0.0
      %337 = vmatpush2.msra.mxu0 0.0
      %338 = vmatprep.subr.mxu0 0.0
      %339 = vmatpush2.msra.mxu0 0.0
      %340 = vmatprep.subr.mxu0 0.0
      %341 = vmatpush2.msra.mxu0 0.0
      %342 = vmatprep.subr.mxu0 0.0
      %343 = vmatpush2.msra.mxu0 0.0
      %344 = vmatprep.subr.mxu0 0.0
      %345 = vmatpush2.msra.mxu0 0.0
      %346 = vmatprep.subr.mxu0 0.0
      %347 = vmatpush2.msra.mxu0 0.0
      %348 = vmatprep.subr.mxu0 0.0
      %349 = vmatpush2.msra.mxu0 0.0
      %350 = vmatprep.subr.mxu0 0.0
      %351 = vmatpush2.msra.mxu0 0.0
      %352 = vmatprep.subr.mxu0 0.0
      %353 = vmatpush2.msra.mxu0 0.0
      %354 = vmatprep.subr.mxu0 0.0
      %355 = vmatpush2.msra.mxu0 0.0
      %356 = vmatprep.subr.mxu0 0.0
      %357 = vmatpush2.msra.mxu0 0.0
      %358 = vmatprep.subr.mxu0 0.0
      %359 = vmatpush2.msra.mxu0 0.0
      %360 = vmatprep.mubr.f32.mxu0 0.0
      %361 = vmatmul.mubr.f32.gmra.mxu0 %v291
      %v362 = vpop.f32.mrf.mxu0
      %v363 = vadd.f32 0.0, %v362
      %v364 = vpop.f32.mrf.mxu0
      %365 = vmatprep.mubr.f32.mxu0 0.0
      %366 = vmatmul.mubr.f32.gmra.mxu0 %v294
      %v367 = vpop.f32.mrf.mxu0
      %v368 = vadd.f32 0.0, %v367
      %v369 = vpop.f32.mrf.mxu0
      %370 = vdwg.mxu0
      %v371 = vadd.f32 %v277, %v363
      %v372 = vadd.f32 %v278, %v368
      %v373 = vld [vmem:[#allocation2 + $0x4] sm:$0xff]
      %v374 = vld [vmem:[#allocation2 + $0xc] sm:$0xff]
      %s375 = scalar_lea.vmem %s1, 128
      %v376 = vld [vmem:[%s375] sm:$0xff]
      %v377 = vld [vmem:[%s375 + $0x8] sm:$0xff]
      %v378 = vld [vmem:[%s375 + $0x10] sm:$0xff]
      %v379 = vld [vmem:[%s375 + $0x18] sm:$0xff]
      %v380 = vld [vmem:[%s375 + $0x20] sm:$0xff]
      %v381 = vld [vmem:[%s375 + $0x28] sm:$0xff]
      %v382 = vld [vmem:[%s375 + $0x30] sm:$0xff]
      %v383 = vld [vmem:[%s375 + $0x38] sm:$0xff]
      %v385 = vsel %vm176, %v373, 0
      %v388 = vsel %vm176, %v374, 0
      %390 = vmatprep.subr.mxu0 0.0
      %391 = vmatpush1.msra.mxu0 0.0
      %392 = vmatprep.subr.mxu0 0.0
      %393 = vmatpush1.msra.mxu0 0.0
      %394 = vmatprep.subr.mxu0 0.0
      %395 = vmatpush1.msra.mxu0 0.0
      %396 = vmatprep.subr.mxu0 0.0
      %397 = vmatpush1.msra.mxu0 0.0
      %398 = vmatprep.subr.mxu0 0.0
      %399 = vmatpush1.msra.mxu0 0.0
      %400 = vmatprep.subr.mxu0 0.0
      %401 = vmatpush1.msra.mxu0 0.0
      %402 = vmatprep.subr.mxu0 0.0
      %403 = vmatpush1.msra.mxu0 0.0
      %404 = vmatprep.subr.mxu0 0.0
      %405 = vmatpush1.msra.mxu0 0.0
      %406 = vmatprep.subr.mxu0 0.0
      %407 = vmatpush1.msra.mxu0 %v383
      %408 = vmatprep.subr.mxu0 0.0
      %409 = vmatpush1.msra.mxu0 %v382
      %410 = vmatprep.subr.mxu0 0.0
      %411 = vmatpush1.msra.mxu0 %v381
      %412 = vmatprep.subr.mxu0 0.0
      %413 = vmatpush1.msra.mxu0 %v380
      %414 = vmatprep.subr.mxu0 0.0
      %415 = vmatpush1.msra.mxu0 %v379
      %416 = vmatprep.subr.mxu0 0.0
      %417 = vmatpush1.msra.mxu0 %v378
      %418 = vmatprep.subr.mxu0 0.0
      %419 = vmatpush1.msra.mxu0 %v377
      %420 = vmatprep.subr.mxu0 0.0
      %421 = vmatpush1.msra.mxu0 %v376
      %422 = vmatprep.subr.mxu0 0.0
      %423 = vmatpush2.msra.mxu0 0.0
      %424 = vmatprep.subr.mxu0 0.0
      %425 = vmatpush2.msra.mxu0 0.0
      %426 = vmatprep.subr.mxu0 0.0
      %427 = vmatpush2.msra.mxu0 0.0
      %428 = vmatprep.subr.mxu0 0.0
      %429 = vmatpush2.msra.mxu0 0.0
      %430 = vmatprep.subr.mxu0 0.0
      %431 = vmatpush2.msra.mxu0 0.0
      %432 = vmatprep.subr.mxu0 0.0
      %433 = vmatpush2.msra.mxu0 0.0
      %434 = vmatprep.subr.mxu0 0.0
      %435 = vmatpush2.msra.mxu0 0.0
      %436 = vmatprep.subr.mxu0 0.0
      %437 = vmatpush2.msra.mxu0 0.0
      %438 = vmatprep.subr.mxu0 0.0
      %439 = vmatpush2.msra.mxu0 0.0
      %440 = vmatprep.subr.mxu0 0.0
      %441 = vmatpush2.msra.mxu0 0.0
      %442 = vmatprep.subr.mxu0 0.0
      %443 = vmatpush2.msra.mxu0 0.0
      %444 = vmatprep.subr.mxu0 0.0
      %445 = vmatpush2.msra.mxu0 0.0
      %446 = vmatprep.subr.mxu0 0.0
      %447 = vmatpush2.msra.mxu0 0.0
      %448 = vmatprep.subr.mxu0 0.0
      %449 = vmatpush2.msra.mxu0 0.0
      %450 = vmatprep.subr.mxu0 0.0
      %451 = vmatpush2.msra.mxu0 0.0
      %452 = vmatprep.subr.mxu0 0.0
      %453 = vmatpush2.msra.mxu0 0.0
      %454 = vmatprep.mubr.f32.mxu0 0.0
      %455 = vmatmul.mubr.f32.gmra.mxu0 %v385
      %v456 = vpop.f32.mrf.mxu0
      %v457 = vadd.f32 0.0, %v456
      %v458 = vpop.f32.mrf.mxu0
      %459 = vmatprep.mubr.f32.mxu0 0.0
      %460 = vmatmul.mubr.f32.gmra.mxu0 %v388
      %v461 = vpop.f32.mrf.mxu0
      %v462 = vadd.f32 0.0, %v461
      %v463 = vpop.f32.mrf.mxu0
      %464 = vdwg.mxu0
      %v465 = vadd.f32 %v371, %v457
      %v466 = vadd.f32 %v372, %v462
      %v467 = vtanh.pop %v465
      %v468 = vtanh.pop %v466
      %469 = vst [vmem:[%s170] sm:$0xff] %v467
      %470 = vst [vmem:[%s170 + $0x8] sm:$0xff] %v468
      %p471 = scmp.lt.s32.totalorder %s14, 1
      %s472 = scalar_select %p471, %s14, 1
      %s473 = smul.addr %s472, 2
      %s474 = smul.addr %s473, 8
      %s475 = scalar_lea.vmem %s3, %s474
      // Predicated region
      $region33: #{rescan_rnn.1} parent=31 // pred_check
        %p476 = pneg %p100
      $region34: #{rescan_rnn.1} parent=31 // pred_check_branch
        %478 = sbr.rel (%p476) target = $region36
      $region35: #{rescan_rnn.1} parent=31 // pred_region
        _
      $region36: #{rescan_rnn.1} parent=31 // pred_fallthru
        _
    $region32: #{rescan_rnn.1} parent=5 // pred_fallthru
      _
    %p479 = scmp.le.s32.totalorder 2, %s9
    // Predicated region
    $region37: #{rescan_rnn.1} parent=5 // pred_check
      %p480 = pneg %p479
    $region38: #{rescan_rnn.1} parent=5 // pred_check_branch
      %482 = sbr.rel (%p480) target = $region40
    $region39: #{rescan_rnn.1} parent=5 // pred_region
      %s483 = ssub.s32 %s9, 2
      // Predicated region
      $region41: #{rescan_rnn.1} parent=39 // pred_check
        %p484 = pneg %p106
      $region42: #{rescan_rnn.1} parent=39 // pred_check_branch
        %486 = sbr.rel (%p484) target = $region44
      $region43: #{rescan_rnn.1} parent=39 // pred_region
        %p487 = scmp.lt.s32.totalorder %s15, 1
        %s488 = scalar_select %p487, %s15, 1
        %s489 = smul.addr %s488, 2
        %s490 = smul.addr %s489, 8
        %s491 = scalar_lea.vmem %s3, %s490
      $region44: #{rescan_rnn.1} parent=39 // pred_fallthru
        _
    $region40: #{rescan_rnn.1} parent=5 // pred_fallthru
      _
  $region6: #{rescan_rnn.1} parent=0 // loop_footer
    %s13 = sadd.s32 1, %s9
  $region7: #{rescan_rnn.1} parent=0 // loop_footer_branch
    %8 = sbr.rel target = $region3
  $region8: #{rescan_rnn.1} parent=0 // loop_exit
    _

</llo_original>
